<compile_context>
chip_gen: v5e
topology: v5e:2x2
jax: 0.10.0
libtpu: 0.0.40
codegen_flags: <defaults>
</compile_context>

<pallas_src>
import functools

import jax
import jax.numpy as jnp
from jax.experimental import pallas as pl
from jax.experimental.pallas import tpu as pltpu

_LANES = 128


def make_positional_table(max_len: int, num_hiddens: int) -> jnp.ndarray:
    """Replicates the PyTorch __init__: P of shape [1, max_len, num_hiddens]."""
    pos = jnp.arange(max_len, dtype=jnp.float32).reshape(-1, 1)
    div = jnp.power(
        10000.0,
        jnp.arange(0, num_hiddens, 2, dtype=jnp.float32) / num_hiddens,
    )
    X = pos / div                                   # [max_len, ceil(H/2)]
    P = jnp.zeros((max_len, num_hiddens), dtype=jnp.float32)
    n_sin = P[:, 0::2].shape[1]
    n_cos = P[:, 1::2].shape[1]
    P = P.at[:, 0::2].set(jnp.sin(X[:, :n_sin]))
    P = P.at[:, 1::2].set(jnp.cos(X[:, :n_cos]))
    return P[None, :, :]                            # [1, max_len, H]


def _pick_row_tile(sh_rows: int, target_rows: int = 2048) -> int:
    """Largest row tile <= target (~1 MiB f32) that divides sh_rows and keeps
    the (8, 128) tiling constraint (multiple of 8, or the full extent)."""
    if sh_rows <= target_rows:
        return sh_rows
    for t in range(target_rows, 0, -8):             # multiples of 8 only
        if sh_rows % t == 0:
            return t
    return sh_rows                                  # fallback: whole extent


def _pe_kernel(seed_ref, x_ref, p_ref, o_ref, *, dropout_p, training,
               tile_rows, sh_rows):
    """One grid step: o = dropout(x + p) on a lane-dense (1, tile_rows, 128) block."""
    y = x_ref[...].astype(jnp.float32) + p_ref[...].astype(jnp.float32)

    if training and dropout_p >= 1.0:
        y = jnp.zeros_like(y)
    elif training and dropout_p > 0.0:
        # Inverted dropout with a stateless counter-based hash RNG: the mask
        # depends only on (seed, global element index), so it is deterministic
        # and identical for any tiling / grid order / core assignment.
        r = pl.program_id(0)                        # row-tile index (outer axis)
        b = pl.program_id(1)                        # batch index   (inner axis)
        shape = (1, tile_rows, _LANES)
        row = jax.lax.broadcasted_iota(jnp.int32, shape, 1)
        lane = jax.lax.broadcasted_iota(jnp.int32, shape, 2)
        base = (b * sh_rows + r * tile_rows) * _LANES
        idx = (base + row * _LANES + lane).astype(jnp.uint32)

        seed = seed_ref[0].astype(jnp.uint32) * jnp.uint32(0x9E3779B9)
        h = idx ^ seed
        # lowbias32 / murmur3-style finalizer: only 32-bit VPU integer ops.
        h = h ^ (h >> 16)
        h = h * jnp.uint32(0x7FEB352D)
        h = h ^ (h >> 15)
        h = h * jnp.uint32(0x846CA68B)
        h = h ^ (h >> 16)

        thresh = jnp.uint32(min(int(dropout_p * (2.0 ** 32)), 2 ** 32 - 1))
        keep = h >= thresh                          # P(keep) = 1 - dropout_p
        scale = jnp.float32(1.0 / (1.0 - dropout_p))
        y = jnp.where(keep, y * scale, 0.0)

    o_ref[...] = y.astype(o_ref.dtype)


def positional_encoding(x, P_table, *, dropout_p=0.1, training=True, seed=0):
    """x: [B, S, H]. Returns dropout(x + P_table[:, :S, :]) with x's shape/dtype."""
    B, S, H = x.shape
    dtype = x.dtype

    # Keep P in x's dtype so its HBM/DMA traffic matches the activations.
    p = P_table[:, :S, :].astype(dtype)

    # Flatten (S, H) to a lane-dense [rows, 128] view (pad the tail if needed)
    # so every load/store is a full, unmasked (8, 128) register tile.
    flat = S * H
    pad = (-flat) % _LANES
    x2 = x.reshape(B, flat)
    p2 = p.reshape(1, flat)
    if pad:
        x2 = jnp.pad(x2, ((0, 0), (0, pad)))
        p2 = jnp.pad(p2, ((0, 0), (0, pad)))
    sh_rows = (flat + pad) // _LANES
    x3 = x2.reshape(B, sh_rows, _LANES)
    p3 = p2.reshape(1, sh_rows, _LANES)

    tile_rows = _pick_row_tile(sh_rows)             # <= ~1 MiB per f32 block
    grid = (sh_rows // tile_rows, B)                # rows outer, batch inner:
    # P's block index is constant across the inner batch axis, so Pallas skips
    # re-fetching the P tile for every batch element.

    seed_arr = jnp.array([seed], dtype=jnp.int32)
    kernel = functools.partial(
        _pe_kernel,
        dropout_p=float(dropout_p),
        training=bool(training),
        tile_rows=tile_rows,
        sh_rows=sh_rows,
    )

    blk = (1, tile_rows, _LANES)
    out = pl.pallas_call(
        kernel,
        out_shape=jax.ShapeDtypeStruct((B, sh_rows, _LANES), dtype),
        grid_spec=pltpu.PrefetchScalarGridSpec(
            num_scalar_prefetch=1,
            grid=grid,
            in_specs=[
                pl.BlockSpec(blk, lambda r, b, seed_ref: (b, r, 0)),  # x
                pl.BlockSpec(blk, lambda r, b, seed_ref: (0, r, 0)),  # P (broadcast over batch)
            ],
            out_specs=pl.BlockSpec(blk, lambda r, b, seed_ref: (b, r, 0)),
        ),
        compiler_params=pltpu.CompilerParams(
            # Stateless hash RNG -> every grid step is independent, so both axes
            # can be sharded across v7x's two TensorCores (no-op on v5e/v6e).
            dimension_semantics=("parallel", "parallel"),
        ),
    )(seed_arr, x3, p3)

    out = out.reshape(B, sh_rows * _LANES)
    if pad:
        out = out[:, :flat]
    return out.reshape(B, S, H)


if __name__ == "__main__":
    # Small shapes consistent with the module's forward: batch=2, seq=8, hidden=32.
    B, S, H = 2, 8, 32
    max_len = 64
    dropout_p = 0.1

    key = jax.random.PRNGKey(0)
    x = jax.random.normal(key, (B, S, H), dtype=jnp.float32)
    P_table = make_positional_table(max_len, H)

    # Training mode: add + deterministic (seeded) inverted dropout, all in-kernel.
    y_train = positional_encoding(
        x, P_table, dropout_p=dropout_p, training=True, seed=1234
    )
    jax.block_until_ready(y_train)

    # Eval mode: dropout is identity -> exact check against a plain-JAX reference.
    y_eval = positional_encoding(x, P_table, dropout_p=dropout_p, training=False)
    jax.block_until_ready(y_eval)
    ref = x + P_table[:, :S, :]
    assert jnp.allclose(y_eval, ref, atol=1e-6, rtol=1e-6), "eval-mode mismatch"

    # Training-mode sanity: kept elements equal ref / (1-p), dropped are exactly 0,
    # and the realized drop fraction is plausible (expected ~= p).
    scaled_ref = ref / (1.0 - dropout_p)
    ok = jnp.all(
        jnp.isclose(y_train, scaled_ref, atol=1e-5, rtol=1e-5) | (y_train == 0.0)
    )
    assert bool(ok), "training-mode dropout mask/scale mismatch"
    frac_dropped = float(jnp.mean((y_train == 0.0).astype(jnp.float32)))
    assert 0.0 < frac_dropped < 0.5, f"implausible drop fraction {frac_dropped}"

    print("KERNEL_OK")
</pallas_src>

<mosaic_0001>
module attributes {stable_mosaic.version = 11 : i64} {
  func.func @_pe_kernel(%arg0: i32, %arg1: i32, %arg2: memref<1xi32, #tpu.memory_space<smem>>, %arg3: memref<1x2x128xf32, #tpu.memory_space<vmem>>, %arg4: memref<1x2x128xf32, #tpu.memory_space<vmem>>, %arg5: memref<1x2x128xf32, #tpu.memory_space<vmem>>) attributes {dimension_semantics = [#tpu.dimension_semantics<parallel>, #tpu.dimension_semantics<parallel>], iteration_bounds = array<i64: 1, 2>, scalar_prefetch = 1 : i64, scratch_operands = 0 : i64, tpu.core_type = #tpu.core_type<tc>, window_params = [{transform_indices = @transform_0, window_bounds = array<i64: 1, 2, 128>}, {transform_indices = @transform_1, window_bounds = array<i64: 1, 2, 128>}, {transform_indices = @transform_2, window_bounds = array<i64: 1, 2, 128>}]} {
    %c0 = arith.constant 0 : index
    %c0_0 = arith.constant 0 : index
    %c0_1 = arith.constant 0 : index
    %0 = vector.load %arg3[%c0, %c0_0, %c0_1] : memref<1x2x128xf32, #tpu.memory_space<vmem>>, vector<1x2x128xf32>
    %c0_2 = arith.constant 0 : index
    %c0_3 = arith.constant 0 : index
    %c0_4 = arith.constant 0 : index
    %1 = vector.load %arg4[%c0_2, %c0_3, %c0_4] : memref<1x2x128xf32, #tpu.memory_space<vmem>>, vector<1x2x128xf32>
    %2 = arith.addf %0, %1 : vector<1x2x128xf32>
    %3 = tpu.iota {dimensions = array<i32: 1>} : vector<1x2x128xi32>
    %4 = tpu.iota {dimensions = array<i32: 2>} : vector<1x2x128xi32>
    %c2_i32 = arith.constant 2 : i32
    %5 = arith.muli %arg1, %c2_i32 : i32
    %c2_i32_5 = arith.constant 2 : i32
    %6 = arith.muli %arg0, %c2_i32_5 : i32
    %7 = arith.addi %5, %6 : i32
    %c128_i32 = arith.constant 128 : i32
    %8 = arith.muli %7, %c128_i32 : i32
    %c128_i32_6 = arith.constant 128 : i32
    %9 = vector.broadcast %c128_i32_6 : i32 to vector<1x2x128xi32>
    %10 = arith.muli %3, %9 : vector<1x2x128xi32>
    %11 = vector.broadcast %8 : i32 to vector<1x2x128xi32>
    %12 = arith.addi %11, %10 : vector<1x2x128xi32>
    %13 = arith.addi %12, %4 : vector<1x2x128xi32>
    %c0_7 = arith.constant 0 : index
    %14 = memref.load %arg2[%c0_7] : memref<1xi32, #tpu.memory_space<smem>>
    %c-1640531527_i32 = arith.constant -1640531527 : i32
    %15 = arith.muli %14, %c-1640531527_i32 : i32
    %16 = vector.broadcast %15 : i32 to vector<1x2x128xi32>
    %17 = arith.xori %13, %16 : vector<1x2x128xi32>
    %c16_i32 = arith.constant 16 : i32
    %18 = vector.broadcast %c16_i32 : i32 to vector<1x2x128xi32>
    %19 = arith.shrui %17, %18 : vector<1x2x128xi32>
    %20 = arith.xori %17, %19 : vector<1x2x128xi32>
    %c2146121005_i32 = arith.constant 2146121005 : i32
    %21 = vector.broadcast %c2146121005_i32 : i32 to vector<1x2x128xi32>
    %22 = arith.muli %20, %21 : vector<1x2x128xi32>
    %c15_i32 = arith.constant 15 : i32
    %23 = vector.broadcast %c15_i32 : i32 to vector<1x2x128xi32>
    %24 = arith.shrui %22, %23 : vector<1x2x128xi32>
    %25 = arith.xori %22, %24 : vector<1x2x128xi32>
    %c-2073254261_i32 = arith.constant -2073254261 : i32
    %26 = vector.broadcast %c-2073254261_i32 : i32 to vector<1x2x128xi32>
    %27 = arith.muli %25, %26 : vector<1x2x128xi32>
    %c16_i32_8 = arith.constant 16 : i32
    %28 = vector.broadcast %c16_i32_8 : i32 to vector<1x2x128xi32>
    %29 = arith.shrui %27, %28 : vector<1x2x128xi32>
    %30 = arith.xori %27, %29 : vector<1x2x128xi32>
    %c429496729_i32 = arith.constant 429496729 : i32
    %31 = vector.broadcast %c429496729_i32 : i32 to vector<1x2x128xi32>
    %32 = arith.cmpi uge, %30, %31 : vector<1x2x128xi32>
    %cst = arith.constant 1.11111116 : f32
    %33 = vector.broadcast %cst : f32 to vector<1x2x128xf32>
    %34 = arith.mulf %2, %33 : vector<1x2x128xf32>
    %cst_9 = arith.constant 0.000000e+00 : f32
    %35 = vector.broadcast %cst_9 : f32 to vector<1x2x128xf32>
    %36 = arith.select %32, %34, %35 : vector<1x2x128xi1>, vector<1x2x128xf32>
    %c0_10 = arith.constant 0 : index
    %c0_11 = arith.constant 0 : index
    %c0_12 = arith.constant 0 : index
    %37 = vector.load %arg5[%c0_10, %c0_11, %c0_12] : memref<1x2x128xf32, #tpu.memory_space<vmem>>, vector<1x2x128xf32>
    tpu.vector_store %arg5[%c0_10, %c0_11, %c0_12], %36 {strides = array<i32>} : memref<1x2x128xf32, #tpu.memory_space<vmem>>, vector<1x2x128xf32>,
    return
  }
  func.func @transform_0(%arg0: i32, %arg1: i32, %arg2: memref<1xi32, #tpu.memory_space<smem>>) -> (i32, i32, i32) {
    %c0_i32 = arith.constant 0 : i32
    %c0_i32_0 = arith.constant 0 : i32
    return %arg1, %arg0, %c0_i32 : i32, i32, i32
  }
  func.func @transform_1(%arg0: i32, %arg1: i32, %arg2: memref<1xi32, #tpu.memory_space<smem>>) -> (i32, i32, i32) {
    %c0_i32 = arith.constant 0 : i32
    %c0_i32_0 = arith.constant 0 : i32
    %c0_i32_1 = arith.constant 0 : i32
    return %c0_i32, %arg0, %c0_i32_0 : i32, i32, i32
  }
  func.func @transform_2(%arg0: i32, %arg1: i32, %arg2: memref<1xi32, #tpu.memory_space<smem>>) -> (i32, i32, i32) {
    %c0_i32 = arith.constant 0 : i32
    %c0_i32_0 = arith.constant 0 : i32
    return %arg1, %arg0, %c0_i32 : i32, i32, i32
  }
}

</mosaic_0001>

<llo_original>
// kernel: tpu_custom_call.1
$region0: #{tpu_custom_call.1}
  #allocation0 [shape = 'u32[]', space=smem, size = 0x4, offset = 0x4, fixed_abs, tag = 'smem constant byte address 0x4 - core index']
  #allocation1 [shape = 'u32[72,128]{1,0:T(1,128)}', space=vmem, size = 0x9000, scoped, tag = 'internal scratch']
  #allocation2 [shape = 's32[1]{0}', space=sflag, size = 0x4, scoped, tag = 'scoped memory for tpu_custom_call.1']
  #allocation3 [shape = 's32[1]{0:T(128)S(6)}', space=smem, size = 0x200, scoped, tag = 'prefetched SMEM operand 0']
  %s0 = inlined_call_operand.<no memory space> [shape: s32[1], index: 0, kind: input, shape index: {}]
  %s1 = inlined_call_operand.hbm [shape: f32[2,2,128], index: 1, kind: input, shape index: {}]
  %s2 = inlined_call_operand.vmem [shape: f32[1,2,128], index: 2, kind: input, shape index: {}]
  %s3 = inlined_call_operand.hbm [shape: f32[2,2,128], index: 3, kind: output, shape index: {}]
  %s4 = sld [smem:[#allocation0]]
  $region45: #{tpu_custom_call.1} parent=0
    _
  %s6 = ssub.s32 1, %s4
  %s7 = scalar_select 0, %s6, %s4
  %8 = sst [smem:[#allocation3]] %s0
  $region1: #{tpu_custom_call.1} parent=0
    #allocation4 [shape = 'u8[2048]{0}', space=vmem, size = 0x800, scoped, tag = 'input window, operand 1']
    #allocation5 [shape = 's32[2]{0}', space=sflag, size = 0x8, scoped, tag = 'scoped memory for tpu_custom_call.1']
    #allocation6 [shape = 's32[2]{0}', space=sflag, size = 0x8, scoped, tag = 'scoped memory for tpu_custom_call.1']
    #allocation7 [shape = 'u8[2048]{0}', space=vmem, size = 0x800, scoped, tag = 'output window, operand 0']
    %9 = vsyncpa [#allocation5], 0
    %s10 = scalar_lea.sflag [#allocation5], 1
    %11 = vsyncpa %s10, 0
    %12 = vsyncpa [#allocation6], 0
    %s13 = scalar_lea.sflag [#allocation6], 1
    %14 = vsyncpa %s13, 0
    loop: start=0, step=1, limit=4
    $region2: #{tpu_custom_call.1} parent=1 // loop_pre_header
      _
    $region3: #{tpu_custom_call.1} parent=1 // loop_header
      %s16 = sphi 0, %s20
      %p17 = scmp.ge.s32.totalorder %s16, 4
      %s23 = sphi 0, %s35
      %s24 = sphi 0, %s31
      %s25 = sphi 0, %s23
      %s26 = sphi 0, %s24
      %s27 = sphi 0, %s25
      %s28 = sphi 0, %s26
      %s40 = sphi 0, %s42
      %s43 = sphi 0, %s40
      %s44 = sphi 0, %s43
      %s60 = sphi 0, %s44
      %s66 = sphi 0, %s68
      %s69 = sphi 0, %s66
      %s70 = sphi 0, %s69
      %s86 = sphi 0, %s70
      %s94 = sphi 0, %s96
      %s97 = sphi 0, %s94
      %s98 = sphi 0, %s97
      %s114 = sphi 0, %s98
    $region4: #{tpu_custom_call.1} parent=1 // loop_header_branch
      %19 = sbr.rel (%p17) target = $region8
    $region5: #{tpu_custom_call.1} parent=1 // loop_body
      %s21 = ssub.s32 %s16, 1
      %s22 = ssub.s32 %s16, 2
      %s29 = sadd.s32 1, %s24
      %p30 = scmp.ge.s32.totalorder %s29, 2
      %s31 = scalar_select %p30, 0, %s29
      %s32 = sadd.s32 1, %s23
      %s33 = scalar_select %p30, %s32, %s23
      %p34 = scmp.ge.s32.totalorder %s33, 1
      %s35 = scalar_select %p34, 0, %s33
      %s36 = ssub.s32 %s24, %s31
      %s37 = ssub.s32 %s23, %s35
      %s38 = sor.u32 %s36, %s37
      %p39 = scmp.eq.s32.totalorder %s38, 0
      %s41 = sadd.s32 %s40, 1
      %s42 = scalar_select %p39, %s40, %s41
      %p45 = pneg %p39
      %p46 = scmp.eq.s32.totalorder %s16, 1
      %p47 = por %p45, %p46
      %p48 = scmp.ne.s32.totalorder %s40, %s43
      %p49 = scmp.eq.s32.totalorder %s16, 0
      %p50 = por %p48, %p49
      %p51 = scmp.ne.s32.totalorder %s40, %s43
      %p52 = scmp.eq.s32.totalorder %s21, 1
      %p53 = por %p51, %p52
      %p54 = scmp.ne.s32.totalorder %s43, %s44
      %p55 = scmp.eq.s32.totalorder %s21, 0
      %p56 = por %p54, %p55
      %p57 = scmp.ne.s32.totalorder %s43, %s44
      %p58 = scmp.eq.s32.totalorder %s22, 1
      %p59 = por %p57, %p58
      %p61 = scmp.ne.s32.totalorder %s44, %s60
      %p62 = scmp.eq.s32.totalorder %s22, 0
      %p63 = por %p61, %p62
      %s64 = ssub.s32 %s23, %s35
      %p65 = scmp.eq.s32.totalorder %s64, 0
      %s67 = sadd.s32 %s66, 1
      %s68 = scalar_select %p65, %s66, %s67
      %p71 = pneg %p65
      %p72 = scmp.eq.s32.totalorder %s16, 1
      %p73 = por %p71, %p72
      %p74 = scmp.ne.s32.totalorder %s66, %s69
      %p75 = scmp.eq.s32.totalorder %s16, 0
      %p76 = por %p74, %p75
      %p77 = scmp.ne.s32.totalorder %s66, %s69
      %p78 = scmp.eq.s32.totalorder %s21, 1
      %p79 = por %p77, %p78
      %p80 = scmp.ne.s32.totalorder %s69, %s70
      %p81 = scmp.eq.s32.totalorder %s21, 0
      %p82 = por %p80, %p81
      %p83 = scmp.ne.s32.totalorder %s69, %s70
      %p84 = scmp.eq.s32.totalorder %s22, 1
      %p85 = por %p83, %p84
      %p87 = scmp.ne.s32.totalorder %s70, %s86
      %p88 = scmp.eq.s32.totalorder %s22, 0
      %p89 = por %p87, %p88
      %s90 = ssub.s32 %s24, %s31
      %s91 = ssub.s32 %s23, %s35
      %s92 = sor.u32 %s90, %s91
      %p93 = scmp.eq.s32.totalorder %s92, 0
      %s95 = sadd.s32 %s94, 1
      %s96 = scalar_select %p93, %s94, %s95
      %p99 = pneg %p93
      %p100 = scmp.eq.s32.totalorder %s16, 1
      %p101 = por %p99, %p100
      %p102 = scmp.ne.s32.totalorder %s94, %s97
      %p103 = scmp.eq.s32.totalorder %s16, 0
      %p104 = por %p102, %p103
      %p105 = scmp.ne.s32.totalorder %s94, %s97
      %p106 = scmp.eq.s32.totalorder %s21, 1
      %p107 = por %p105, %p106
      %p108 = scmp.ne.s32.totalorder %s97, %s98
      %p109 = scmp.eq.s32.totalorder %s21, 0
      %p110 = por %p108, %p109
      %p111 = scmp.ne.s32.totalorder %s97, %s98
      %p112 = scmp.eq.s32.totalorder %s22, 1
      %p113 = por %p111, %p112
      %p115 = scmp.ne.s32.totalorder %s98, %s114
      %p116 = scmp.eq.s32.totalorder %s22, 0
      %p117 = por %p115, %p116
      %p118 = scmp.le.s32.totalorder 1, %s16
      %p119 = scmp.lt.s32.totalorder %s16, 3
      %p120 = pnand %p118, %p119
      %p121 = pneg %p120
      // Predicated region
      $region9: #{tpu_custom_call.1} parent=5 // pred_check
        _
      $region10: #{tpu_custom_call.1} parent=5 // pred_check_branch
        %123 = sbr.rel (%p120) target = $region12
      $region11: #{tpu_custom_call.1} parent=5 // pred_region
        %s124 = ssub.s32 %s16, 1
        // Predicated region
        $region13: #{tpu_custom_call.1} parent=11 // pred_check
          %p125 = pneg %p82
        $region14: #{tpu_custom_call.1} parent=11 // pred_check_branch
          %127 = sbr.rel (%p125) target = $region16
        $region15: #{tpu_custom_call.1} parent=11 // pred_region
          %p128 = scmp.lt.s32.totalorder %s25, 0
          %s129 = scalar_select %p128, %s25, 0
          %s130 = smul.addr %s129, 2
          %s131 = scalar_lea.vmem %s2, %s130
        $region16: #{tpu_custom_call.1} parent=11 // pred_fallthru
          _
      $region12: #{tpu_custom_call.1} parent=5 // pred_fallthru
        _
      %p132 = scmp.lt.s32.totalorder %s16, 2
      // Predicated region
      $region17: #{tpu_custom_call.1} parent=5 // pred_check
        %p133 = pneg %p132
      $region18: #{tpu_custom_call.1} parent=5 // pred_check_branch
        %135 = sbr.rel (%p133) target = $region20
      $region19: #{tpu_custom_call.1} parent=5 // pred_region
        // Predicated region
        $region21: #{tpu_custom_call.1} parent=19 // pred_check
          %p136 = pneg %p50
        $region22: #{tpu_custom_call.1} parent=19 // pred_check_branch
          %138 = sbr.rel (%p136) target = $region24
        $region23: #{tpu_custom_call.1} parent=19 // pred_region
          %s139 = sand.u32 %s40, 1
          %s140 = scalar_lea.sflag [#allocation5], %s139
          %s141 = sand.u32 %s40, 1
          %s142 = smul.addr %s141, 2
          %s143 = scalar_lea.vmem [#allocation4], %s142
          %145 = vsyncadd %s140, 0
          %s146 = sadd.s32 %s23, %s24
          %s147 = smul.addr %s146, 2
          %s148 = scalar_lea.hbm %s1, %s147
          %s150 = sshll.u32 %s148, 4
          %s151 = int_to_ptr.hbm [resolvable:$true] %s150
          %s152 = sshll.u32 %s143, 4
          %s153 = int_to_ptr.vmem [resolvable:$true] %s152
          %155 = dma.hbm_to_vmem [thread:$0]  %s151, 32, %s153, %s140
        $region24: #{tpu_custom_call.1} parent=19 // pred_fallthru
          _
      $region20: #{tpu_custom_call.1} parent=5 // pred_fallthru
        _
      %p156 = scmp.le.s32.totalorder 1, %s16
      %p157 = scmp.lt.s32.totalorder %s16, 3
      %p158 = pnand %p156, %p157
      %p159 = pneg %p158
      // Predicated region
      $region25: #{tpu_custom_call.1} parent=5 // pred_check
        _
      $region26: #{tpu_custom_call.1} parent=5 // pred_check_branch
        %161 = sbr.rel (%p158) target = $region28
      $region27: #{tpu_custom_call.1} parent=5 // pred_region
        %s162 = ssub.s32 %s16, 1
        %s163 = sand.u32 %s43, 1
        %s164 = scalar_lea.sflag [#allocation5], %s163
        %s165 = sand.u32 %s43, 1
        %s166 = smul.addr %s165, 2
        %s167 = scalar_lea.vmem [#allocation4], %s166
        // Predicated region
        $region29: #{tpu_custom_call.1} parent=27 // pred_check
          %p168 = pneg %p56
        $region30: #{tpu_custom_call.1} parent=27 // pred_check_branch
          %170 = sbr.rel (%p168) target = $region32
        $region31: #{tpu_custom_call.1} parent=27 // pred_region
          %172 = dma.done %s164, 32
        $region32: #{tpu_custom_call.1} parent=27 // pred_fallthru
          _
        %s173 = sand.u32 %s43, 1
        %s174 = scalar_lea.sflag [#allocation5], %s173
        %s175 = sand.u32 %s43, 1
        %s176 = smul.addr %s175, 2
        %s177 = scalar_lea.vmem [#allocation4], %s176
        %p178 = pneg %p56
        %p179 = pneg %p53
        %p180 = scmp.lt.s32.totalorder %s25, 0
        %s181 = scalar_select %p180, %s25, 0
        %s182 = smul.addr %s181, 2
        %s183 = scalar_lea.vmem %s2, %s182
        %p184 = pneg %p82
        %p185 = pneg %p79
        %p186 = pneg %p110
        %p187 = pneg %p107
        %s188 = sand.u32 %s97, 1
        %s189 = scalar_lea.sflag [#allocation6], %s188
        %s190 = sand.u32 %s97, 1
        %s191 = smul.addr %s190, 2
        %s192 = scalar_lea.vmem [#allocation7], %s191
        %p193 = scmp.lt.s32.totalorder %s25, 0
        %s194 = scalar_select %p193, %s25, 0
        %s195 = smul.addr %s194, 2
        %s196 = scalar_lea.vmem %s2, %s195
        %v197 = vld [vmem:[%s167] sm:$0x3]
        %v198 = vld [vmem:[%s196] sm:$0x3]
        %v199 = vadd.f32 %v197, %v198
        %v200 = vlaneseq
        %v201 = vshrl.u32 %v200, 7
        %v202 = vlaneseq
        %v203 = vand.u32 %v202, 127
        %s204 = smul.u32 %s26, 2
        %s205 = smul.u32 %s25, 2
        %s206 = sadd.s32 %s204, %s205
        %s207 = smul.u32 %s206, 128
        %v208 = vmul.u32 %v201, 128
        %v209 = vstv %s207
        %v210 = vadd.s32 %v209, %v208
        %v211 = vadd.s32 %v210, %v203
        %s212 = sld [smem:[#allocation3]]
        %s213 = smul.u32 %s212, 2654435769
        %v214 = vstv %s213
        %v215 = vxor.u32 %v211, %v214
        %v216 = vshrl.u32 %v215, 16
        %v217 = vxor.u32 %v215, %v216
        %v218 = vmul.u32 %v217, 2146121005
        %v219 = vshrl.u32 %v218, 15
        %v220 = vxor.u32 %v218, %v219
        %v221 = vmul.u32 %v220, 2221713035
        %v222 = vshrl.u32 %v221, 16
        %v223 = vxor.u32 %v221, %v222
        %v224 = vadd.s32 %v223, 2147483648
        %vm226 = vcmp.ge.s32.totalorder %v224, 2576980377
        %v227 = vmul.f32 %v199, 1.1111112
        %v228 = vsel %vm226, %v227, 0.0
        %229 = vst [vmem:[%s192] sm:$0x3] %v228
        %s230 = sand.u32 %s97, 1
        %s231 = scalar_lea.sflag [#allocation6], %s230
        %s232 = sand.u32 %s97, 1
        %s233 = smul.addr %s232, 2
        %s234 = scalar_lea.vmem [#allocation7], %s233
        // Predicated region
        $region33: #{tpu_custom_call.1} parent=27 // pred_check
          %p235 = pneg %p107
        $region34: #{tpu_custom_call.1} parent=27 // pred_check_branch
          %237 = sbr.rel (%p235) target = $region36
        $region35: #{tpu_custom_call.1} parent=27 // pred_region
          %239 = vsyncadd %s231, 0
          %s240 = sadd.s32 %s25, %s26
          %s241 = smul.addr %s240, 2
          %s242 = scalar_lea.hbm %s3, %s241
          %s244 = sshll.u32 %s234, 4
          %s245 = int_to_ptr.vmem [resolvable:$true] %s244
          %s246 = sshll.u32 %s242, 4
          %s247 = int_to_ptr.hbm [resolvable:$true] %s246
          %249 = dma.vmem_to_hbm [thread:$0]  %s245, 32, %s247, %s231
        $region36: #{tpu_custom_call.1} parent=27 // pred_fallthru
          _
      $region28: #{tpu_custom_call.1} parent=5 // pred_fallthru
        _
      %p250 = scmp.le.s32.totalorder 2, %s16
      // Predicated region
      $region37: #{tpu_custom_call.1} parent=5 // pred_check
        %p251 = pneg %p250
      $region38: #{tpu_custom_call.1} parent=5 // pred_check_branch
        %253 = sbr.rel (%p251) target = $region40
      $region39: #{tpu_custom_call.1} parent=5 // pred_region
        %s254 = ssub.s32 %s16, 2
        // Predicated region
        $region41: #{tpu_custom_call.1} parent=39 // pred_check
          %p255 = pneg %p113
        $region42: #{tpu_custom_call.1} parent=39 // pred_check_branch
          %257 = sbr.rel (%p255) target = $region44
        $region43: #{tpu_custom_call.1} parent=39 // pred_region
          %s258 = sand.u32 %s98, 1
          %s259 = scalar_lea.sflag [#allocation6], %s258
          %s260 = sand.u32 %s98, 1
          %s261 = smul.addr %s260, 2
          %s262 = scalar_lea.vmem [#allocation7], %s261
          %264 = dma.done %s259, 32
        $region44: #{tpu_custom_call.1} parent=39 // pred_fallthru
          _
      $region40: #{tpu_custom_call.1} parent=5 // pred_fallthru
        _
    $region6: #{tpu_custom_call.1} parent=1 // loop_footer
      %s20 = sadd.s32 1, %s16
    $region7: #{tpu_custom_call.1} parent=1 // loop_footer_branch
      %15 = sbr.rel target = $region3
    $region8: #{tpu_custom_call.1} parent=1 // loop_exit
      _
    %265 = vsyncpa [#allocation5], 1
    %s266 = scalar_lea.sflag [#allocation5], 1
    %267 = vsyncpa %s266, 1
    %268 = vsyncpa [#allocation6], 1
    %s269 = scalar_lea.sflag [#allocation6], 1
    %270 = vsyncpa %s269, 1

</llo_original>
